<compile_context>
chip_gen: v6e
topology: v6e:2x2x1
jax: 0.10.0
libtpu: 0.0.40
codegen_flags: <defaults>
</compile_context>

<pallas_src>
import functools

import jax
import jax.numpy as jnp
from jax.experimental import pallas as pl
from jax.experimental.pallas import tpu as pltpu

NEG_SLOPE = 0.01  # torch.nn.functional.leaky_relu default
LANE = 128


def _mlp_kernel(n_layers, *refs):
    """refs = (x_ref, w0_ref, b0_ref, ..., w{L-1}_ref, b{L-1}_ref, out_ref).

    Feature-major layout: x_ref is (in_size, tb); w_i is (out_i, in_i) (native
    torch layout); b_i is (out_i, 1); out_ref is (out_size, tb).
    """
    x_ref = refs[0]
    out_ref = refs[-1]
    param_refs = refs[1:-1]

    h = x_ref[...]
    for i in range(n_layers):
        w_ref = param_refs[2 * i]
        b_ref = param_refs[2 * i + 1]
        if i > 0:
            # leaky_relu BETWEEN layers only (not after the last layer)
            h = jnp.where(h > 0, h, NEG_SLOPE * h)
        h = jnp.dot(w_ref[...], h, preferred_element_type=jnp.float32) + b_ref[...]
    out_ref[...] = h.astype(out_ref.dtype)


def _round_up(v, m):
    return ((v + m - 1) // m) * m


def _cdiv(a, b):
    return -(-a // b)


def _choose_tiling(batch, block_cols):
    """Pick (tile_lanes, n_tiles): minimal batch padding, lane-aligned tiles,
    and an even (>=2) grid step count when the batch allows it so v7x's two
    TensorCores split the work evenly."""
    n_tiles = max(1, _cdiv(batch, block_cols))
    if batch > LANE and n_tiles % 2 == 1:
        n_tiles = 2 if n_tiles == 1 else n_tiles + 1
    tb = _round_up(_cdiv(batch, n_tiles), LANE)
    return tb, n_tiles


def nn_v_forward(x, weights, biases, *, block_cols=2048):
    """Full MLP forward pass in one batch-tiled Pallas kernel.

    x:       (B, inSize) float32               (PyTorch-style batch-major input)
    weights: list of (out_i, in_i) float32     (native torch nn.Linear layout)
    biases:  list of (out_i, 1) float32
    Returns (B, outSize) float32.
    """
    x = jnp.asarray(x, jnp.float32)
    B, in_size = x.shape
    out_size = int(weights[-1].shape[0])
    n_layers = len(weights)

    tb, n_tiles = _choose_tiling(B, block_cols)
    b_padded = tb * n_tiles

    # Feature-major input: (in_size, B) with batch in lanes, zero-padded lanes.
    xt = jnp.transpose(x)
    if b_padded != B:
        xt = jnp.pad(xt, ((0, 0), (0, b_padded - B)))

    grid = (n_tiles,)

    flops = 2 * b_padded * sum(int(w.shape[0]) * int(w.shape[1]) for w in weights)
    param_bytes = 4 * (sum(int(w.size) for w in weights) + sum(int(b.size) for b in biases))
    bytes_accessed = int(4 * b_padded * (in_size + out_size) + param_bytes)

    # Real VMEM footprint: double-buffered x/out tiles + params + intermediate
    # activations (spill scratch), with generous headroom — not a blanket 32 MiB.
    io_tile_bytes = 4 * tb * (in_size + out_size)
    act_bytes = 4 * tb * sum(int(w.shape[0]) for w in weights)
    vmem_needed = 2 * io_tile_bytes + 2 * param_bytes + 2 * act_bytes
    vmem_limit = int(min(64 * 1024 * 1024, max(8 * 1024 * 1024, 4 * vmem_needed)))

    kernel = functools.partial(_mlp_kernel, n_layers)

    def _call(single_buffer_params):
        in_specs = [pl.BlockSpec((in_size, tb), lambda i: (0, i))]
        args = [xt]
        for w, b in zip(weights, biases):
            if single_buffer_params:
                # Constant index_map => VMEM-resident across tiles; one buffer.
                in_specs.append(pl.BlockSpec(w.shape, lambda i: (0, 0),
                                             pipeline_mode=pl.Buffered(1)))
                in_specs.append(pl.BlockSpec(b.shape, lambda i: (0, 0),
                                             pipeline_mode=pl.Buffered(1)))
            else:
                in_specs.append(pl.BlockSpec(w.shape, lambda i: (0, 0)))
                in_specs.append(pl.BlockSpec(b.shape, lambda i: (0, 0)))
            args.append(w)
            args.append(b)
        out_specs = pl.BlockSpec((out_size, tb), lambda i: (0, i))

        return pl.pallas_call(
            kernel,
            out_shape=jax.ShapeDtypeStruct((out_size, b_padded), jnp.float32),
            grid=grid,
            in_specs=in_specs,
            out_specs=out_specs,
            compiler_params=pltpu.CompilerParams(
                dimension_semantics=("parallel",),  # batch tiles across TCs on v7x
                vmem_limit_bytes=vmem_limit,
            ),
            cost_estimate=pl.CostEstimate(
                flops=flops, transcendentals=0, bytes_accessed=bytes_accessed
            ),
        )(*args)

    try:
        out_t = _call(True)
    except Exception:
        out_t = _call(False)  # fallback if pl.Buffered(1) is not supported

    # (out_size, b_padded) -> (B, out_size); trivial reshape when out_size == 1.
    return jnp.transpose(out_t[:, :B])


def init_nn_v_params(key, in_size, out_size, layers):
    """Deterministic init mimicking torch.nn.Linear default:
    U(-1/sqrt(fan_in), 1/sqrt(fan_in)) for weight and bias.
    Weights stored in native torch layout (out, in); biases as (out, 1)."""
    sizes = [in_size] + list(layers) + [out_size]
    weights, biases = [], []
    for i in range(len(sizes) - 1):
        fan_in, fan_out = sizes[i], sizes[i + 1]
        key, kw, kb = jax.random.split(key, 3)
        bound = 1.0 / (fan_in ** 0.5)
        w = jax.random.uniform(kw, (fan_out, fan_in), jnp.float32, -bound, bound)
        b = jax.random.uniform(kb, (fan_out, 1), jnp.float32, -bound, bound)
        weights.append(w)
        biases.append(b)
    return weights, biases


def nn_v_reference(x, weights, biases):
    """Pure-JAX reference of the PyTorch forward (batch-major)."""
    hi = jax.lax.Precision.HIGHEST
    h = jnp.dot(x, weights[0].T, precision=hi) + biases[0].reshape(1, -1)
    for i in range(1, len(weights)):
        h = jnp.where(h > 0, h, NEG_SLOPE * h)
        h = jnp.dot(h, weights[i].T, precision=hi) + biases[i].reshape(1, -1)
    return h


if __name__ == "__main__":
    # LunarLander-v2 value net: obs dim 8 -> hidden [32, 32] -> scalar value
    in_size, out_size, hidden = 8, 1, [32, 32]
    batch = 8

    key = jax.random.PRNGKey(0)
    key, kx = jax.random.split(key)
    x = jax.random.normal(kx, (batch, in_size), jnp.float32)
    weights, biases = init_nn_v_params(key, in_size, out_size, hidden)

    out = jax.block_until_ready(nn_v_forward(x, weights, biases))
    ref = nn_v_reference(x, weights, biases)
    assert out.shape == (batch, out_size), out.shape
    assert jnp.allclose(out, ref, atol=5e-3, rtol=5e-3), (out, ref)

    # Batch that is not a multiple of the tile: exercises even multi-tile grid
    # and lane-padding path (pads 1037 -> 1280 lanes, 2 tiles of 640).
    key, kx2 = jax.random.split(key)
    x2 = jax.random.normal(kx2, (1037, in_size), jnp.float32)
    out2 = jax.block_until_ready(nn_v_forward(x2, weights, biases))
    ref2 = nn_v_reference(x2, weights, biases)
    assert out2.shape == (1037, out_size), out2.shape
    assert jnp.allclose(out2, ref2, atol=5e-3, rtol=5e-3)

    print("KERNEL_OK")
</pallas_src>

<mosaic_0001>
module attributes {stable_mosaic.version = 11 : i64} {
  func.func @_mlp_kernel(%arg0: i32, %arg1: memref<8x128xf32, #tpu.memory_space<vmem>>, %arg2: memref<32x8xf32, #tpu.memory_space<vmem>>, %arg3: memref<32x1xf32, #tpu.memory_space<vmem>>, %arg4: memref<32x32xf32, #tpu.memory_space<vmem>>, %arg5: memref<32x1xf32, #tpu.memory_space<vmem>>, %arg6: memref<1x32xf32, #tpu.memory_space<vmem>>, %arg7: memref<1x1xf32, #tpu.memory_space<vmem>>, %arg8: memref<1x128xf32, #tpu.memory_space<vmem>>) attributes {dimension_semantics = [#tpu.dimension_semantics<parallel>], iteration_bounds = array<i64: 1>, scalar_prefetch = 0 : i64, scratch_operands = 0 : i64, tpu.core_type = #tpu.core_type<tc>, window_params = [{transform_indices = @transform_0, window_bounds = array<i64: 8, 128>}, {pipeline_mode = #tpu.pipeline_mode<synchronous>, transform_indices = @transform_1, window_bounds = array<i64: 32, 8>}, {pipeline_mode = #tpu.pipeline_mode<synchronous>, transform_indices = @transform_2, window_bounds = array<i64: 32, 1>}, {pipeline_mode = #tpu.pipeline_mode<synchronous>, transform_indices = @transform_3, window_bounds = array<i64: 32, 32>}, {pipeline_mode = #tpu.pipeline_mode<synchronous>, transform_indices = @transform_4, window_bounds = array<i64: 32, 1>}, {pipeline_mode = #tpu.pipeline_mode<synchronous>, transform_indices = @transform_5, window_bounds = array<i64: 1, 32>}, {pipeline_mode = #tpu.pipeline_mode<synchronous>, transform_indices = @transform_6, window_bounds = array<i64: 1, 1>}, {transform_indices = @transform_7, window_bounds = array<i64: 1, 128>}]} {
    %c0 = arith.constant 0 : index
    %c0_0 = arith.constant 0 : index
    %0 = vector.load %arg1[%c0, %c0_0] : memref<8x128xf32, #tpu.memory_space<vmem>>, vector<8x128xf32>
    %c0_1 = arith.constant 0 : index
    %c0_2 = arith.constant 0 : index
    %1 = vector.load %arg2[%c0_1, %c0_2] : memref<32x8xf32, #tpu.memory_space<vmem>>, vector<32x8xf32>
    %cst = arith.constant dense<0.000000e+00> : vector<32x128xf32>
    %2 = tpu.matmul %1, %0, %cst {dimension_numbers = #tpu.dot_dimension_numbers<[1], [0], [0], [1], [0, 0, 1, 1], [], []>} : vector<32x8xf32>, vector<8x128xf32>, vector<32x128xf32> -> vector<32x128xf32>
    %c0_3 = arith.constant 0 : index
    %c0_4 = arith.constant 0 : index
    %3 = vector.load %arg3[%c0_3, %c0_4] : memref<32x1xf32, #tpu.memory_space<vmem>>, vector<32x1xf32>
    %4 = vector.broadcast %3 : vector<32x1xf32> to vector<32x128xf32>
    %5 = arith.addf %2, %4 : vector<32x128xf32>
    %cst_5 = arith.constant 0.000000e+00 : f32
    %6 = vector.broadcast %cst_5 : f32 to vector<32x128xf32>
    %7 = arith.cmpf ogt, %5, %6 : vector<32x128xf32>
    %cst_6 = arith.constant 0.00999999977 : f32
    %8 = vector.broadcast %cst_6 : f32 to vector<32x128xf32>
    %9 = arith.mulf %8, %5 : vector<32x128xf32>
    %10 = arith.select %7, %5, %9 : vector<32x128xi1>, vector<32x128xf32>
    %c0_7 = arith.constant 0 : index
    %c0_8 = arith.constant 0 : index
    %11 = vector.load %arg4[%c0_7, %c0_8] : memref<32x32xf32, #tpu.memory_space<vmem>>, vector<32x32xf32>
    %cst_9 = arith.constant dense<0.000000e+00> : vector<32x128xf32>
    %12 = tpu.matmul %11, %10, %cst_9 {dimension_numbers = #tpu.dot_dimension_numbers<[1], [0], [0], [1], [0, 0, 1, 1], [], []>} : vector<32x32xf32>, vector<32x128xf32>, vector<32x128xf32> -> vector<32x128xf32>
    %c0_10 = arith.constant 0 : index
    %c0_11 = arith.constant 0 : index
    %13 = vector.load %arg5[%c0_10, %c0_11] : memref<32x1xf32, #tpu.memory_space<vmem>>, vector<32x1xf32>
    %14 = vector.broadcast %13 : vector<32x1xf32> to vector<32x128xf32>
    %15 = arith.addf %12, %14 : vector<32x128xf32>
    %cst_12 = arith.constant 0.000000e+00 : f32
    %16 = vector.broadcast %cst_12 : f32 to vector<32x128xf32>
    %17 = arith.cmpf ogt, %15, %16 : vector<32x128xf32>
    %cst_13 = arith.constant 0.00999999977 : f32
    %18 = vector.broadcast %cst_13 : f32 to vector<32x128xf32>
    %19 = arith.mulf %18, %15 : vector<32x128xf32>
    %20 = arith.select %17, %15, %19 : vector<32x128xi1>, vector<32x128xf32>
    %c0_14 = arith.constant 0 : index
    %c0_15 = arith.constant 0 : index
    %21 = vector.load %arg6[%c0_14, %c0_15] : memref<1x32xf32, #tpu.memory_space<vmem>>, vector<1x32xf32>
    %cst_16 = arith.constant dense<0.000000e+00> : vector<1x128xf32>
    %22 = tpu.matmul %21, %20, %cst_16 {dimension_numbers = #tpu.dot_dimension_numbers<[1], [0], [0], [1], [0, 0, 1, 1], [], []>} : vector<1x32xf32>, vector<32x128xf32>, vector<1x128xf32> -> vector<1x128xf32>
    %c0_17 = arith.constant 0 : index
    %c0_18 = arith.constant 0 : index
    %23 = vector.load %arg7[%c0_17, %c0_18] : memref<1x1xf32, #tpu.memory_space<vmem>>, vector<1x1xf32>
    %24 = vector.broadcast %23 : vector<1x1xf32> to vector<1x128xf32>
    %25 = arith.addf %22, %24 : vector<1x128xf32>
    %c0_19 = arith.constant 0 : index
    %c0_20 = arith.constant 0 : index
    %26 = vector.load %arg8[%c0_19, %c0_20] : memref<1x128xf32, #tpu.memory_space<vmem>>, vector<1x128xf32>
    tpu.vector_store %arg8[%c0_19, %c0_20], %25 {strides = array<i32>} : memref<1x128xf32, #tpu.memory_space<vmem>>, vector<1x128xf32>,
    return
  }
  func.func @transform_0(%arg0: i32) -> (i32, i32) {
    %c0_i32 = arith.constant 0 : i32
    %c0_i32_0 = arith.constant 0 : i32
    return %c0_i32, %arg0 : i32, i32
  }
  func.func @transform_1(%arg0: i32) -> (i32, i32) {
    %c0_i32 = arith.constant 0 : i32
    %c0_i32_0 = arith.constant 0 : i32
    %c0_i32_1 = arith.constant 0 : i32
    return %c0_i32, %c0_i32_0 : i32, i32
  }
  func.func @transform_2(%arg0: i32) -> (i32, i32) {
    %c0_i32 = arith.constant 0 : i32
    %c0_i32_0 = arith.constant 0 : i32
    %c0_i32_1 = arith.constant 0 : i32
    return %c0_i32, %c0_i32_0 : i32, i32
  }
  func.func @transform_3(%arg0: i32) -> (i32, i32) {
    %c0_i32 = arith.constant 0 : i32
    %c0_i32_0 = arith.constant 0 : i32
    %c0_i32_1 = arith.constant 0 : i32
    return %c0_i32, %c0_i32_0 : i32, i32
  }
  func.func @transform_4(%arg0: i32) -> (i32, i32) {
    %c0_i32 = arith.constant 0 : i32
    %c0_i32_0 = arith.constant 0 : i32
    %c0_i32_1 = arith.constant 0 : i32
    return %c0_i32, %c0_i32_0 : i32, i32
  }
  func.func @transform_5(%arg0: i32) -> (i32, i32) {
    %c0_i32 = arith.constant 0 : i32
    %c0_i32_0 = arith.constant 0 : i32
    %c0_i32_1 = arith.constant 0 : i32
    return %c0_i32, %c0_i32_0 : i32, i32
  }
  func.func @transform_6(%arg0: i32) -> (i32, i32) {
    %c0_i32 = arith.constant 0 : i32
    %c0_i32_0 = arith.constant 0 : i32
    %c0_i32_1 = arith.constant 0 : i32
    return %c0_i32, %c0_i32_0 : i32, i32
  }
  func.func @transform_7(%arg0: i32) -> (i32, i32) {
    %c0_i32 = arith.constant 0 : i32
    %c0_i32_0 = arith.constant 0 : i32
    return %c0_i32, %arg0 : i32, i32
  }
}

module attributes {stable_mosaic.version = 11 : i64} {
  func.func @_mlp_kernel(%arg0: i32, %arg1: memref<8x128xf32, #tpu.memory_space<vmem>>, %arg2: memref<32x8xf32, #tpu.memory_space<vmem>>, %arg3: memref<32x1xf32, #tpu.memory_space<vmem>>, %arg4: memref<32x32xf32, #tpu.memory_space<vmem>>, %arg5: memref<32x1xf32, #tpu.memory_space<vmem>>, %arg6: memref<1x32xf32, #tpu.memory_space<vmem>>, %arg7: memref<1x1xf32, #tpu.memory_space<vmem>>, %arg8: memref<1x128xf32, #tpu.memory_space<vmem>>) attributes {dimension_semantics = [#tpu.dimension_semantics<parallel>], iteration_bounds = array<i64: 1>, scalar_prefetch = 0 : i64, scratch_operands = 0 : i64, tpu.core_type = #tpu.core_type<tc>, window_params = [{transform_indices = @transform_0, window_bounds = array<i64: 8, 128>}, {pipeline_mode = #tpu.pipeline_mode<synchronous>, transform_indices = @transform_1, window_bounds = array<i64: 32, 8>}, {pipeline_mode = #tpu.pipeline_mode<synchronous>, transform_indices = @transform_2, window_bounds = array<i64: 32, 1>}, {pipeline_mode = #tpu.pipeline_mode<synchronous>, transform_indices = @transform_3, window_bounds = array<i64: 32, 32>}, {pipeline_mode = #tpu.pipeline_mode<synchronous>, transform_indices = @transform_4, window_bounds = array<i64: 32, 1>}, {pipeline_mode = #tpu.pipeline_mode<synchronous>, transform_indices = @transform_5, window_bounds = array<i64: 1, 32>}, {pipeline_mode = #tpu.pipeline_mode<synchronous>, transform_indices = @transform_6, window_bounds = array<i64: 1, 1>}, {transform_indices = @transform_7, window_bounds = array<i64: 1, 128>}]} {
    %c0 = arith.constant 0 : index
    %c0_0 = arith.constant 0 : index
    %0 = vector.load %arg1[%c0, %c0_0] : memref<8x128xf32, #tpu.memory_space<vmem>>, vector<8x128xf32>
    %c0_1 = arith.constant 0 : index
    %c0_2 = arith.constant 0 : index
    %1 = vector.load %arg2[%c0_1, %c0_2] : memref<32x8xf32, #tpu.memory_space<vmem>>, vector<32x8xf32>
    %cst = arith.constant dense<0.000000e+00> : vector<32x128xf32>
    %2 = tpu.matmul %1, %0, %cst {dimension_numbers = #tpu.dot_dimension_numbers<[1], [0], [0], [1], [0, 0, 1, 1], [], []>} : vector<32x8xf32>, vector<8x128xf32>, vector<32x128xf32> -> vector<32x128xf32>
    %c0_3 = arith.constant 0 : index
    %c0_4 = arith.constant 0 : index
    %3 = vector.load %arg3[%c0_3, %c0_4] : memref<32x1xf32, #tpu.memory_space<vmem>>, vector<32x1xf32>
    %4 = vector.broadcast %3 : vector<32x1xf32> to vector<32x128xf32>
    %5 = arith.addf %2, %4 : vector<32x128xf32>
    %cst_5 = arith.constant 0.000000e+00 : f32
    %6 = vector.broadcast %cst_5 : f32 to vector<32x128xf32>
    %7 = arith.cmpf ogt, %5, %6 : vector<32x128xf32>
    %cst_6 = arith.constant 0.00999999977 : f32
    %8 = vector.broadcast %cst_6 : f32 to vector<32x128xf32>
    %9 = arith.mulf %8, %5 : vector<32x128xf32>
    %10 = arith.select %7, %5, %9 : vector<32x128xi1>, vector<32x128xf32>
    %c0_7 = arith.constant 0 : index
    %c0_8 = arith.constant 0 : index
    %11 = vector.load %arg4[%c0_7, %c0_8] : memref<32x32xf32, #tpu.memory_space<vmem>>, vector<32x32xf32>
    %cst_9 = arith.constant dense<0.000000e+00> : vector<32x128xf32>
    %12 = tpu.matmul %11, %10, %cst_9 {dimension_numbers = #tpu.dot_dimension_numbers<[1], [0], [0], [1], [0, 0, 1, 1], [], []>} : vector<32x32xf32>, vector<32x128xf32>, vector<32x128xf32> -> vector<32x128xf32>
    %c0_10 = arith.constant 0 : index
    %c0_11 = arith.constant 0 : index
    %13 = vector.load %arg5[%c0_10, %c0_11] : memref<32x1xf32, #tpu.memory_space<vmem>>, vector<32x1xf32>
    %14 = vector.broadcast %13 : vector<32x1xf32> to vector<32x128xf32>
    %15 = arith.addf %12, %14 : vector<32x128xf32>
    %cst_12 = arith.constant 0.000000e+00 : f32
    %16 = vector.broadcast %cst_12 : f32 to vector<32x128xf32>
    %17 = arith.cmpf ogt, %15, %16 : vector<32x128xf32>
    %cst_13 = arith.constant 0.00999999977 : f32
    %18 = vector.broadcast %cst_13 : f32 to vector<32x128xf32>
    %19 = arith.mulf %18, %15 : vector<32x128xf32>
    %20 = arith.select %17, %15, %19 : vector<32x128xi1>, vector<32x128xf32>
    %c0_14 = arith.constant 0 : index
    %c0_15 = arith.constant 0 : index
    %21 = vector.load %arg6[%c0_14, %c0_15] : memref<1x32xf32, #tpu.memory_space<vmem>>, vector<1x32xf32>
    %cst_16 = arith.constant dense<0.000000e+00> : vector<1x128xf32>
    %22 = tpu.matmul %21, %20, %cst_16 {dimension_numbers = #tpu.dot_dimension_numbers<[1], [0], [0], [1], [0, 0, 1, 1], [], []>} : vector<1x32xf32>, vector<32x128xf32>, vector<1x128xf32> -> vector<1x128xf32>
    %c0_17 = arith.constant 0 : index
    %c0_18 = arith.constant 0 : index
    %23 = vector.load %arg7[%c0_17, %c0_18] : memref<1x1xf32, #tpu.memory_space<vmem>>, vector<1x1xf32>
    %24 = vector.broadcast %23 : vector<1x1xf32> to vector<1x128xf32>
    %25 = arith.addf %22, %24 : vector<1x128xf32>
    %c0_19 = arith.constant 0 : index
    %c0_20 = arith.constant 0 : index
    %26 = vector.load %arg8[%c0_19, %c0_20] : memref<1x128xf32, #tpu.memory_space<vmem>>, vector<1x128xf32>
    tpu.vector_store %arg8[%c0_19, %c0_20], %25 {strides = array<i32>} : memref<1x128xf32, #tpu.memory_space<vmem>>, vector<1x128xf32>,
    return
  }
  func.func @transform_0(%arg0: i32) -> (i32, i32) {
    %c0_i32 = arith.constant 0 : i32
    %c0_i32_0 = arith.constant 0 : i32
    return %c0_i32, %arg0 : i32, i32
  }
  func.func @transform_1(%arg0: i32) -> (i32, i32) {
    %c0_i32 = arith.constant 0 : i32
    %c0_i32_0 = arith.constant 0 : i32
    %c0_i32_1 = arith.constant 0 : i32
    return %c0_i32, %c0_i32_0 : i32, i32
  }
  func.func @transform_2(%arg0: i32) -> (i32, i32) {
    %c0_i32 = arith.constant 0 : i32
    %c0_i32_0 = arith.constant 0 : i32
    %c0_i32_1 = arith.constant 0 : i32
    return %c0_i32, %c0_i32_0 : i32, i32
  }
  func.func @transform_3(%arg0: i32) -> (i32, i32) {
    %c0_i32 = arith.constant 0 : i32
    %c0_i32_0 = arith.constant 0 : i32
    %c0_i32_1 = arith.constant 0 : i32
    return %c0_i32, %c0_i32_0 : i32, i32
  }
  func.func @transform_4(%arg0: i32) -> (i32, i32) {
    %c0_i32 = arith.constant 0 : i32
    %c0_i32_0 = arith.constant 0 : i32
    %c0_i32_1 = arith.constant 0 : i32
    return %c0_i32, %c0_i32_0 : i32, i32
  }
  func.func @transform_5(%arg0: i32) -> (i32, i32) {
    %c0_i32 = arith.constant 0 : i32
    %c0_i32_0 = arith.constant 0 : i32
    %c0_i32_1 = arith.constant 0 : i32
    return %c0_i32, %c0_i32_0 : i32, i32
  }
  func.func @transform_6(%arg0: i32) -> (i32, i32) {
    %c0_i32 = arith.constant 0 : i32
    %c0_i32_0 = arith.constant 0 : i32
    %c0_i32_1 = arith.constant 0 : i32
    return %c0_i32, %c0_i32_0 : i32, i32
  }
  func.func @transform_7(%arg0: i32) -> (i32, i32) {
    %c0_i32 = arith.constant 0 : i32
    %c0_i32_0 = arith.constant 0 : i32
    return %c0_i32, %arg0 : i32, i32
  }
}

</mosaic_0001>

<llo_original>
// kernel: tpu_custom_call.1
$region0: #{tpu_custom_call.1}
  #allocation0 [shape = 'u32[]', space=smem, size = 0x4, offset = 0x4, fixed_abs, tag = 'smem constant byte address 0x4 - core index']
  #allocation1 [shape = 'u32[144,128]{1,0:T(1,128)}', space=vmem, size = 0x12000, scoped, tag = 'internal scratch']
  #allocation2 [shape = 'f32[1,1]{1,0:T(1,128)S(1)}', space=vmem, size = 0x200, scoped, tag = 'scoped memory for tpu_custom_call.1']
  %s0 = inlined_call_operand.vmem [shape: f32[8,128], index: 0, kind: input, shape index: {}]
  %s1 = inlined_call_operand.vmem [shape: f32[32,8], index: 1, kind: input, shape index: {}]
  %s2 = inlined_call_operand.vmem [shape: f32[32,1], index: 2, kind: input, shape index: {}]
  %s3 = inlined_call_operand.vmem [shape: f32[32,32], index: 3, kind: input, shape index: {}]
  %s4 = inlined_call_operand.vmem [shape: f32[32,1], index: 4, kind: input, shape index: {}]
  %s5 = inlined_call_operand.vmem [shape: f32[1,32], index: 5, kind: input, shape index: {}]
  %s6 = inlined_call_operand.<no memory space> [shape: f32[1,1], index: 6, kind: input, shape index: {}]
  %s7 = inlined_call_operand.hbm [shape: f32[1,128], index: 7, kind: output, shape index: {}]
  %s8 = sld [smem:[#allocation0]]
  $region38: #{tpu_custom_call.1} parent=0
    _
  %s10 = ssub.s32 1, %s8
  %s11 = scalar_select 0, %s10, %s8
  %v12 = vstv %s6
  %13 = vst [vmem:[#allocation2] sm:$0x1] %v12
  $region1: #{tpu_custom_call.1} parent=0
    #allocation3 [shape = 'u8[512]{0}', space=vmem, size = 0x400, scoped, tag = 'output window, operand 0, single buffered']
    #allocation4 [shape = 's32[1]{0}', space=sflag, size = 0x4, scoped, tag = 'scoped memory for tpu_custom_call.1']
    %14 = vsyncpa [#allocation4], 0
    // Predicated region
    $region2: #{tpu_custom_call.1} parent=1 // pred_check
      _
    $region3: #{tpu_custom_call.1} parent=1 // pred_check_branch
      %16 = sbr.rel (0) target = $region5
    $region4: #{tpu_custom_call.1} parent=1 // pred_region
      _
    $region5: #{tpu_custom_call.1} parent=1 // pred_fallthru
      _
    // Predicated region
    $region6: #{tpu_custom_call.1} parent=1 // pred_check
      _
    $region7: #{tpu_custom_call.1} parent=1 // pred_check_branch
      %18 = sbr.rel (0) target = $region9
    $region8: #{tpu_custom_call.1} parent=1 // pred_region
      _
    $region9: #{tpu_custom_call.1} parent=1 // pred_fallthru
      _
    // Predicated region
    $region10: #{tpu_custom_call.1} parent=1 // pred_check
      _
    $region11: #{tpu_custom_call.1} parent=1 // pred_check_branch
      %20 = sbr.rel (0) target = $region13
    $region12: #{tpu_custom_call.1} parent=1 // pred_region
      _
    $region13: #{tpu_custom_call.1} parent=1 // pred_fallthru
      _
    // Predicated region
    $region14: #{tpu_custom_call.1} parent=1 // pred_check
      _
    $region15: #{tpu_custom_call.1} parent=1 // pred_check_branch
      %22 = sbr.rel (0) target = $region17
    $region16: #{tpu_custom_call.1} parent=1 // pred_region
      _
    $region17: #{tpu_custom_call.1} parent=1 // pred_fallthru
      _
    // Predicated region
    $region18: #{tpu_custom_call.1} parent=1 // pred_check
      _
    $region19: #{tpu_custom_call.1} parent=1 // pred_check_branch
      %24 = sbr.rel (0) target = $region21
    $region20: #{tpu_custom_call.1} parent=1 // pred_region
      _
    $region21: #{tpu_custom_call.1} parent=1 // pred_fallthru
      _
    // Predicated region
    $region22: #{tpu_custom_call.1} parent=1 // pred_check
      _
    $region23: #{tpu_custom_call.1} parent=1 // pred_check_branch
      %26 = sbr.rel (0) target = $region25
    $region24: #{tpu_custom_call.1} parent=1 // pred_region
      _
    $region25: #{tpu_custom_call.1} parent=1 // pred_fallthru
      _
    // Predicated region
    $region26: #{tpu_custom_call.1} parent=1 // pred_check
      _
    $region27: #{tpu_custom_call.1} parent=1 // pred_check_branch
      %28 = sbr.rel (0) target = $region29
    $region28: #{tpu_custom_call.1} parent=1 // pred_region
      _
    $region29: #{tpu_custom_call.1} parent=1 // pred_fallthru
      _
    %v29 = vld [vmem:[%s0] sm:$0xff]
    %v30 = vld [vmem:[%s1] sm:$0xff]
    %v31 = vld [vmem:[%s1 + $0x8] sm:$0xff]
    %v32 = vld [vmem:[%s1 + $0x10] sm:$0xff]
    %v33 = vld [vmem:[%s1 + $0x18] sm:$0xff]
    %v34 = vld [vmem:[%s2] sm:$0xff]
    %v35 = vld [vmem:[%s2 + $0x8] sm:$0xff]
    %v36 = vld [vmem:[%s2 + $0x10] sm:$0xff]
    %v37 = vld [vmem:[%s2 + $0x18] sm:$0xff]
    %39 = vset.pattern.permute.xlu0 0
    %40 = vperm.xlu0 %39, %v34
    %v41 = vpop.permute.xlu0 %40
    %44 = vset.pattern.permute.xlu0 0
    %45 = vperm.xlu0 %44, %v35
    %v46 = vpop.permute.xlu0 %45
    %49 = vset.pattern.permute.xlu0 0
    %50 = vperm.xlu0 %49, %v36
    %v51 = vpop.permute.xlu0 %50
    %54 = vset.pattern.permute.xlu0 0
    %55 = vperm.xlu0 %54, %v37
    %v56 = vpop.permute.xlu0 %55
    %vm58 = vcmask 64512
    %v60 = vsel %vm58, %v30, 0
    %v63 = vsel %vm58, %v31, 0
    %v66 = vsel %vm58, %v32, 0
    %v69 = vsel %vm58, %v33, 0
    %71 = vmatprep.subr.mxu0 0.0
    %72 = vmatpush1.msra.mxu0 0.0
    %73 = vmatprep.subr.mxu0 0.0
    %74 = vmatpush1.msra.mxu0 0.0
    %75 = vmatprep.subr.mxu0 0.0
    %76 = vmatpush1.msra.mxu0 0.0
    %77 = vmatprep.subr.mxu0 0.0
    %78 = vmatpush1.msra.mxu0 0.0
    %79 = vmatprep.subr.mxu0 0.0
    %80 = vmatpush1.msra.mxu0 0.0
    %81 = vmatprep.subr.mxu0 0.0
    %82 = vmatpush1.msra.mxu0 0.0
    %83 = vmatprep.subr.mxu0 0.0
    %84 = vmatpush1.msra.mxu0 0.0
    %85 = vmatprep.subr.mxu0 0.0
    %86 = vmatpush1.msra.mxu0 0.0
    %87 = vmatprep.subr.mxu0 0.0
    %88 = vmatpush1.msra.mxu0 0.0
    %89 = vmatprep.subr.mxu0 0.0
    %90 = vmatpush1.msra.mxu0 0.0
    %91 = vmatprep.subr.mxu0 0.0
    %92 = vmatpush1.msra.mxu0 0.0
    %93 = vmatprep.subr.mxu0 0.0
    %94 = vmatpush1.msra.mxu0 0.0
    %95 = vmatprep.subr.mxu0 0.0
    %96 = vmatpush1.msra.mxu0 0.0
    %97 = vmatprep.subr.mxu0 0.0
    %98 = vmatpush1.msra.mxu0 0.0
    %99 = vmatprep.subr.mxu0 0.0
    %100 = vmatpush1.msra.mxu0 0.0
    %101 = vmatprep.subr.mxu0 0.0
    %102 = vmatpush1.msra.mxu0 %v29
    %103 = vmatprep.subr.mxu0 0.0
    %104 = vmatpush2.msra.mxu0 0.0
    %105 = vmatprep.subr.mxu0 0.0
    %106 = vmatpush2.msra.mxu0 0.0
    %107 = vmatprep.subr.mxu0 0.0
    %108 = vmatpush2.msra.mxu0 0.0
    %109 = vmatprep.subr.mxu0 0.0
    %110 = vmatpush2.msra.mxu0 0.0
    %111 = vmatprep.subr.mxu0 0.0
    %112 = vmatpush2.msra.mxu0 0.0
    %113 = vmatprep.subr.mxu0 0.0
    %114 = vmatpush2.msra.mxu0 0.0
    %115 = vmatprep.subr.mxu0 0.0
    %116 = vmatpush2.msra.mxu0 0.0
    %117 = vmatprep.subr.mxu0 0.0
    %118 = vmatpush2.msra.mxu0 0.0
    %119 = vmatprep.subr.mxu0 0.0
    %120 = vmatpush2.msra.mxu0 0.0
    %121 = vmatprep.subr.mxu0 0.0
    %122 = vmatpush2.msra.mxu0 0.0
    %123 = vmatprep.subr.mxu0 0.0
    %124 = vmatpush2.msra.mxu0 0.0
    %125 = vmatprep.subr.mxu0 0.0
    %126 = vmatpush2.msra.mxu0 0.0
    %127 = vmatprep.subr.mxu0 0.0
    %128 = vmatpush2.msra.mxu0 0.0
    %129 = vmatprep.subr.mxu0 0.0
    %130 = vmatpush2.msra.mxu0 0.0
    %131 = vmatprep.subr.mxu0 0.0
    %132 = vmatpush2.msra.mxu0 0.0
    %133 = vmatprep.subr.mxu0 0.0
    %134 = vmatpush2.msra.mxu0 0.0
    %135 = vmatprep.mubr.f32.mxu0 0.0
    %136 = vmatmul.mubr.f32.gmra.mxu0 %v60
    %v137 = vpop.f32.mrf.mxu0
    %v138 = vadd.f32 %v41, %v137
    %v139 = vpop.f32.mrf.mxu0
    %140 = vmatprep.mubr.f32.mxu0 0.0
    %141 = vmatmul.mubr.f32.gmra.mxu0 %v63
    %v142 = vpop.f32.mrf.mxu0
    %v143 = vadd.f32 %v46, %v142
    %v144 = vpop.f32.mrf.mxu0
    %145 = vmatprep.mubr.f32.mxu0 0.0
    %146 = vmatmul.mubr.f32.gmra.mxu0 %v66
    %v147 = vpop.f32.mrf.mxu0
    %v148 = vadd.f32 %v51, %v147
    %v149 = vpop.f32.mrf.mxu0
    %150 = vmatprep.mubr.f32.mxu0 0.0
    %151 = vmatmul.mubr.f32.gmra.mxu0 %v69
    %v152 = vpop.f32.mrf.mxu0
    %v153 = vadd.f32 %v56, %v152
    %v154 = vpop.f32.mrf.mxu0
    %155 = vdwg.mxu0
    %vm156 = vcmp.gt.f32.partialorder %v138, 0.0
    %vm157 = vcmp.gt.f32.partialorder %v143, 0.0
    %vm158 = vcmp.gt.f32.partialorder %v148, 0.0
    %vm159 = vcmp.gt.f32.partialorder %v153, 0.0
    %v160 = vmul.f32 %v138, 0.01
    %v161 = vmul.f32 %v143, 0.01
    %v162 = vmul.f32 %v148, 0.01
    %v163 = vmul.f32 %v153, 0.01
    %v164 = vsel %vm156, %v138, %v160
    %v165 = vsel %vm157, %v143, %v161
    %v166 = vsel %vm158, %v148, %v162
    %v167 = vsel %vm159, %v153, %v163
    %v168 = vld [vmem:[%s3] sm:$0xff]
    %v169 = vld [vmem:[%s3 + $0x8] sm:$0xff]
    %v170 = vld [vmem:[%s3 + $0x10] sm:$0xff]
    %v171 = vld [vmem:[%s3 + $0x18] sm:$0xff]
    %v172 = vld [vmem:[%s4] sm:$0xff]
    %v173 = vld [vmem:[%s4 + $0x8] sm:$0xff]
    %v174 = vld [vmem:[%s4 + $0x10] sm:$0xff]
    %v175 = vld [vmem:[%s4 + $0x18] sm:$0xff]
    %177 = vset.pattern.permute.xlu0 0
    %178 = vperm.xlu0 %177, %v172
    %v179 = vpop.permute.xlu0 %178
    %182 = vset.pattern.permute.xlu0 0
    %183 = vperm.xlu0 %182, %v173
    %v184 = vpop.permute.xlu0 %183
    %187 = vset.pattern.permute.xlu0 0
    %188 = vperm.xlu0 %187, %v174
    %v189 = vpop.permute.xlu0 %188
    %192 = vset.pattern.permute.xlu0 0
    %193 = vperm.xlu0 %192, %v175
    %v194 = vpop.permute.xlu0 %193
    %vm196 = vcmask 261120
    %v198 = vsel %vm196, %v168, 0
    %v201 = vsel %vm196, %v169, 0
    %v204 = vsel %vm196, %v170, 0
    %v207 = vsel %vm196, %v171, 0
    %209 = vmatprep.subr.mxu0 0.0
    %210 = vmatpush1.msra.mxu0 0.0
    %211 = vmatprep.subr.mxu0 0.0
    %212 = vmatpush1.msra.mxu0 0.0
    %213 = vmatprep.subr.mxu0 0.0
    %214 = vmatpush1.msra.mxu0 0.0
    %215 = vmatprep.subr.mxu0 0.0
    %216 = vmatpush1.msra.mxu0 0.0
    %217 = vmatprep.subr.mxu0 0.0
    %218 = vmatpush1.msra.mxu0 0.0
    %219 = vmatprep.subr.mxu0 0.0
    %220 = vmatpush1.msra.mxu0 0.0
    %221 = vmatprep.subr.mxu0 0.0
    %222 = vmatpush1.msra.mxu0 0.0
    %223 = vmatprep.subr.mxu0 0.0
    %224 = vmatpush1.msra.mxu0 0.0
    %225 = vmatprep.subr.mxu0 0.0
    %226 = vmatpush1.msra.mxu0 0.0
    %227 = vmatprep.subr.mxu0 0.0
    %228 = vmatpush1.msra.mxu0 0.0
    %229 = vmatprep.subr.mxu0 0.0
    %230 = vmatpush1.msra.mxu0 0.0
    %231 = vmatprep.subr.mxu0 0.0
    %232 = vmatpush1.msra.mxu0 0.0
    %233 = vmatprep.subr.mxu0 0.0
    %234 = vmatpush1.msra.mxu0 %v167
    %235 = vmatprep.subr.mxu0 0.0
    %236 = vmatpush1.msra.mxu0 %v166
    %237 = vmatprep.subr.mxu0 0.0
    %238 = vmatpush1.msra.mxu0 %v165
    %239 = vmatprep.subr.mxu0 0.0
    %240 = vmatpush1.msra.mxu0 %v164
    %241 = vmatprep.subr.mxu0 0.0
    %242 = vmatpush2.msra.mxu0 0.0
    %243 = vmatprep.subr.mxu0 0.0
    %244 = vmatpush2.msra.mxu0 0.0
    %245 = vmatprep.subr.mxu0 0.0
    %246 = vmatpush2.msra.mxu0 0.0
    %247 = vmatprep.subr.mxu0 0.0
    %248 = vmatpush2.msra.mxu0 0.0
    %249 = vmatprep.subr.mxu0 0.0
    %250 = vmatpush2.msra.mxu0 0.0
    %251 = vmatprep.subr.mxu0 0.0
    %252 = vmatpush2.msra.mxu0 0.0
    %253 = vmatprep.subr.mxu0 0.0
    %254 = vmatpush2.msra.mxu0 0.0
    %255 = vmatprep.subr.mxu0 0.0
    %256 = vmatpush2.msra.mxu0 0.0
    %257 = vmatprep.subr.mxu0 0.0
    %258 = vmatpush2.msra.mxu0 0.0
    %259 = vmatprep.subr.mxu0 0.0
    %260 = vmatpush2.msra.mxu0 0.0
    %261 = vmatprep.subr.mxu0 0.0
    %262 = vmatpush2.msra.mxu0 0.0
    %263 = vmatprep.subr.mxu0 0.0
    %264 = vmatpush2.msra.mxu0 0.0
    %265 = vmatprep.subr.mxu0 0.0
    %266 = vmatpush2.msra.mxu0 0.0
    %267 = vmatprep.subr.mxu0 0.0
    %268 = vmatpush2.msra.mxu0 0.0
    %269 = vmatprep.subr.mxu0 0.0
    %270 = vmatpush2.msra.mxu0 0.0
    %271 = vmatprep.subr.mxu0 0.0
    %272 = vmatpush2.msra.mxu0 0.0
    %273 = vmatprep.mubr.f32.mxu0 0.0
    %274 = vmatmul.mubr.f32.gmra.mxu0 %v198
    %v275 = vpop.f32.mrf.mxu0
    %v276 = vadd.f32 %v179, %v275
    %v277 = vpop.f32.mrf.mxu0
    %278 = vmatprep.mubr.f32.mxu0 0.0
    %279 = vmatmul.mubr.f32.gmra.mxu0 %v201
    %v280 = vpop.f32.mrf.mxu0
    %v281 = vadd.f32 %v184, %v280
    %v282 = vpop.f32.mrf.mxu0
    %283 = vmatprep.mubr.f32.mxu0 0.0
    %284 = vmatmul.mubr.f32.gmra.mxu0 %v204
    %v285 = vpop.f32.mrf.mxu0
    %v286 = vadd.f32 %v189, %v285
    %v287 = vpop.f32.mrf.mxu0
    %288 = vmatprep.mubr.f32.mxu0 0.0
    %289 = vmatmul.mubr.f32.gmra.mxu0 %v207
    %v290 = vpop.f32.mrf.mxu0
    %v291 = vadd.f32 %v194, %v290
    %v292 = vpop.f32.mrf.mxu0
    %293 = vdwg.mxu0
    %vm294 = vcmp.gt.f32.partialorder %v276, 0.0
    %vm295 = vcmp.gt.f32.partialorder %v281, 0.0
    %vm296 = vcmp.gt.f32.partialorder %v286, 0.0
    %vm297 = vcmp.gt.f32.partialorder %v291, 0.0
    %v298 = vmul.f32 %v276, 0.01
    %v299 = vmul.f32 %v281, 0.01
    %v300 = vmul.f32 %v286, 0.01
    %v301 = vmul.f32 %v291, 0.01
    %v302 = vsel %vm294, %v276, %v298
    %v303 = vsel %vm295, %v281, %v299
    %v304 = vsel %vm296, %v286, %v300
    %v305 = vsel %vm297, %v291, %v301
    %v306 = vld [vmem:[%s5] sm:$0x1]
    %v307 = vld [vmem:[#allocation2] sm:$0x1]
    %309 = vset.pattern.permute.xlu0 0
    %310 = vperm.xlu0 %309, %v307
    %v311 = vpop.permute.xlu0 %310
    %v313 = vlaneseq
    %v314 = vshrl.u32 %v313, 7
    %v315 = vsub.s32 0, %v314
    %v316 = vrot.slane %v311, %v315
    %v318 = vsel %vm196, %v306, 0
    %320 = vmatprep.subr.mxu0 0.0
    %321 = vmatpush1.msra.mxu0 0.0
    %322 = vmatprep.subr.mxu0 0.0
    %323 = vmatpush1.msra.mxu0 0.0
    %324 = vmatprep.subr.mxu0 0.0
    %325 = vmatpush1.msra.mxu0 0.0
    %326 = vmatprep.subr.mxu0 0.0
    %327 = vmatpush1.msra.mxu0 0.0
    %328 = vmatprep.subr.mxu0 0.0
    %329 = vmatpush1.msra.mxu0 0.0
    %330 = vmatprep.subr.mxu0 0.0
    %331 = vmatpush1.msra.mxu0 0.0
    %332 = vmatprep.subr.mxu0 0.0
    %333 = vmatpush1.msra.mxu0 0.0
    %334 = vmatprep.subr.mxu0 0.0
    %335 = vmatpush1.msra.mxu0 0.0
    %336 = vmatprep.subr.mxu0 0.0
    %337 = vmatpush1.msra.mxu0 0.0
    %338 = vmatprep.subr.mxu0 0.0
    %339 = vmatpush1.msra.mxu0 0.0
    %340 = vmatprep.subr.mxu0 0.0
    %341 = vmatpush1.msra.mxu0 0.0
    %342 = vmatprep.subr.mxu0 0.0
    %343 = vmatpush1.msra.mxu0 0.0
    %344 = vmatprep.subr.mxu0 0.0
    %345 = vmatpush1.msra.mxu0 %v305
    %346 = vmatprep.subr.mxu0 0.0
    %347 = vmatpush1.msra.mxu0 %v304
    %348 = vmatprep.subr.mxu0 0.0
    %349 = vmatpush1.msra.mxu0 %v303
    %350 = vmatprep.subr.mxu0 0.0
    %351 = vmatpush1.msra.mxu0 %v302
    %352 = vmatprep.subr.mxu0 0.0
    %353 = vmatpush2.msra.mxu0 0.0
    %354 = vmatprep.subr.mxu0 0.0
    %355 = vmatpush2.msra.mxu0 0.0
    %356 = vmatprep.subr.mxu0 0.0
    %357 = vmatpush2.msra.mxu0 0.0
    %358 = vmatprep.subr.mxu0 0.0
    %359 = vmatpush2.msra.mxu0 0.0
    %360 = vmatprep.subr.mxu0 0.0
    %361 = vmatpush2.msra.mxu0 0.0
    %362 = vmatprep.subr.mxu0 0.0
    %363 = vmatpush2.msra.mxu0 0.0
    %364 = vmatprep.subr.mxu0 0.0
    %365 = vmatpush2.msra.mxu0 0.0
    %366 = vmatprep.subr.mxu0 0.0
    %367 = vmatpush2.msra.mxu0 0.0
    %368 = vmatprep.subr.mxu0 0.0
    %369 = vmatpush2.msra.mxu0 0.0
    %370 = vmatprep.subr.mxu0 0.0
    %371 = vmatpush2.msra.mxu0 0.0
    %372 = vmatprep.subr.mxu0 0.0
    %373 = vmatpush2.msra.mxu0 0.0
    %374 = vmatprep.subr.mxu0 0.0
    %375 = vmatpush2.msra.mxu0 0.0
    %376 = vmatprep.subr.mxu0 0.0
    %377 = vmatpush2.msra.mxu0 0.0
    %378 = vmatprep.subr.mxu0 0.0
    %379 = vmatpush2.msra.mxu0 0.0
    %380 = vmatprep.subr.mxu0 0.0
    %381 = vmatpush2.msra.mxu0 0.0
    %382 = vmatprep.subr.mxu0 0.0
    %383 = vmatpush2.msra.mxu0 0.0
    %384 = vmatprep.mubr.f32.mxu0 0.0
    %385 = vmatmul.mubr.f32.gmra.mxu0 %v318
    %v386 = vpop.f32.mrf.mxu0
    %v387 = vadd.f32 %v316, %v386
    %v388 = vpop.f32.mrf.mxu0
    %389 = vdwg.mxu0
    %390 = vst [vmem:[#allocation3] sm:$0x1] %v387
    // Predicated region
    $region30: #{tpu_custom_call.1} parent=1 // pred_check
      _
    $region31: #{tpu_custom_call.1} parent=1 // pred_check_branch
      %392 = sbr.rel (0) target = $region33
    $region32: #{tpu_custom_call.1} parent=1 // pred_region
      %s394 = ssub.s32 16, 16
      %395 = vsyncadd [#allocation4], %s394
      %s397 = sshll.u32 [#allocation3], 4
      %s398 = int_to_ptr.vmem [resolvable:$true] %s397
      %400 = dma.vmem_to_hbm [thread:$0]  %s398, 16, %s7, [#allocation4]
    $region33: #{tpu_custom_call.1} parent=1 // pred_fallthru
      _
    // Predicated region
    $region34: #{tpu_custom_call.1} parent=1 // pred_check
      _
    $region35: #{tpu_custom_call.1} parent=1 // pred_check_branch
      %402 = sbr.rel (0) target = $region37
    $region36: #{tpu_custom_call.1} parent=1 // pred_region
      %403 = dma.done [#allocation4], 16
    $region37: #{tpu_custom_call.1} parent=1 // pred_fallthru
      _
    %404 = vsyncpa [#allocation4], 1

// kernel: tpu_custom_call.1
$region0: #{tpu_custom_call.1}
  #allocation0 [shape = 'u32[]', space=smem, size = 0x4, offset = 0x4, fixed_abs, tag = 'smem constant byte address 0x4 - core index']
  #allocation1 [shape = 'u32[144,128]{1,0:T(1,128)}', space=vmem, size = 0x12000, scoped, tag = 'internal scratch']
  #allocation2 [shape = 'f32[1,1]{1,0:T(1,128)S(1)}', space=vmem, size = 0x200, scoped, tag = 'scoped memory for tpu_custom_call.1']
  %s0 = inlined_call_operand.vmem [shape: f32[8,128], index: 0, kind: input, shape index: {}]
  %s1 = inlined_call_operand.vmem [shape: f32[32,8], index: 1, kind: input, shape index: {}]
  %s2 = inlined_call_operand.vmem [shape: f32[32,1], index: 2, kind: input, shape index: {}]
  %s3 = inlined_call_operand.vmem [shape: f32[32,32], index: 3, kind: input, shape index: {}]
  %s4 = inlined_call_operand.vmem [shape: f32[32,1], index: 4, kind: input, shape index: {}]
  %s5 = inlined_call_operand.vmem [shape: f32[1,32], index: 5, kind: input, shape index: {}]
  %s6 = inlined_call_operand.<no memory space> [shape: f32[1,1], index: 6, kind: input, shape index: {}]
  %s7 = inlined_call_operand.hbm [shape: f32[1,128], index: 7, kind: output, shape index: {}]
  %s8 = sld [smem:[#allocation0]]
  $region38: #{tpu_custom_call.1} parent=0
    _
  %s10 = ssub.s32 1, %s8
  %s11 = scalar_select 0, %s10, %s8
  %v12 = vstv %s6
  %13 = vst [vmem:[#allocation2] sm:$0x1] %v12
  $region1: #{tpu_custom_call.1} parent=0
    #allocation3 [shape = 'u8[512]{0}', space=vmem, size = 0x400, scoped, tag = 'output window, operand 0, single buffered']
    #allocation4 [shape = 's32[1]{0}', space=sflag, size = 0x4, scoped, tag = 'scoped memory for tpu_custom_call.1']
    %14 = vsyncpa [#allocation4], 0
    // Predicated region
    $region2: #{tpu_custom_call.1} parent=1 // pred_check
      _
    $region3: #{tpu_custom_call.1} parent=1 // pred_check_branch
      %16 = sbr.rel (0) target = $region5
    $region4: #{tpu_custom_call.1} parent=1 // pred_region
      _
    $region5: #{tpu_custom_call.1} parent=1 // pred_fallthru
      _
    // Predicated region
    $region6: #{tpu_custom_call.1} parent=1 // pred_check
      _
    $region7: #{tpu_custom_call.1} parent=1 // pred_check_branch
      %18 = sbr.rel (0) target = $region9
    $region8: #{tpu_custom_call.1} parent=1 // pred_region
      _
    $region9: #{tpu_custom_call.1} parent=1 // pred_fallthru
      _
    // Predicated region
    $region10: #{tpu_custom_call.1} parent=1 // pred_check
      _
    $region11: #{tpu_custom_call.1} parent=1 // pred_check_branch
      %20 = sbr.rel (0) target = $region13
    $region12: #{tpu_custom_call.1} parent=1 // pred_region
      _
    $region13: #{tpu_custom_call.1} parent=1 // pred_fallthru
      _
    // Predicated region
    $region14: #{tpu_custom_call.1} parent=1 // pred_check
      _
    $region15: #{tpu_custom_call.1} parent=1 // pred_check_branch
      %22 = sbr.rel (0) target = $region17
    $region16: #{tpu_custom_call.1} parent=1 // pred_region
      _
    $region17: #{tpu_custom_call.1} parent=1 // pred_fallthru
      _
    // Predicated region
    $region18: #{tpu_custom_call.1} parent=1 // pred_check
      _
    $region19: #{tpu_custom_call.1} parent=1 // pred_check_branch
      %24 = sbr.rel (0) target = $region21
    $region20: #{tpu_custom_call.1} parent=1 // pred_region
      _
    $region21: #{tpu_custom_call.1} parent=1 // pred_fallthru
      _
    // Predicated region
    $region22: #{tpu_custom_call.1} parent=1 // pred_check
      _
    $region23: #{tpu_custom_call.1} parent=1 // pred_check_branch
      %26 = sbr.rel (0) target = $region25
    $region24: #{tpu_custom_call.1} parent=1 // pred_region
      _
    $region25: #{tpu_custom_call.1} parent=1 // pred_fallthru
      _
    // Predicated region
    $region26: #{tpu_custom_call.1} parent=1 // pred_check
      _
    $region27: #{tpu_custom_call.1} parent=1 // pred_check_branch
      %28 = sbr.rel (0) target = $region29
    $region28: #{tpu_custom_call.1} parent=1 // pred_region
      _
    $region29: #{tpu_custom_call.1} parent=1 // pred_fallthru
      _
    %v29 = vld [vmem:[%s0] sm:$0xff]
    %v30 = vld [vmem:[%s1] sm:$0xff]
    %v31 = vld [vmem:[%s1 + $0x8] sm:$0xff]
    %v32 = vld [vmem:[%s1 + $0x10] sm:$0xff]
    %v33 = vld [vmem:[%s1 + $0x18] sm:$0xff]
    %v34 = vld [vmem:[%s2] sm:$0xff]
    %v35 = vld [vmem:[%s2 + $0x8] sm:$0xff]
    %v36 = vld [vmem:[%s2 + $0x10] sm:$0xff]
    %v37 = vld [vmem:[%s2 + $0x18] sm:$0xff]
    %39 = vset.pattern.permute.xlu0 0
    %40 = vperm.xlu0 %39, %v34
    %v41 = vpop.permute.xlu0 %40
    %44 = vset.pattern.permute.xlu0 0
    %45 = vperm.xlu0 %44, %v35
    %v46 = vpop.permute.xlu0 %45
    %49 = vset.pattern.permute.xlu0 0
    %50 = vperm.xlu0 %49, %v36
    %v51 = vpop.permute.xlu0 %50
    %54 = vset.pattern.permute.xlu0 0
    %55 = vperm.xlu0 %54, %v37
    %v56 = vpop.permute.xlu0 %55
    %vm58 = vcmask 64512
    %v60 = vsel %vm58, %v30, 0
    %v63 = vsel %vm58, %v31, 0
    %v66 = vsel %vm58, %v32, 0
    %v69 = vsel %vm58, %v33, 0
    %71 = vmatprep.subr.mxu0 0.0
    %72 = vmatpush1.msra.mxu0 0.0
    %73 = vmatprep.subr.mxu0 0.0
    %74 = vmatpush1.msra.mxu0 0.0
    %75 = vmatprep.subr.mxu0 0.0
    %76 = vmatpush1.msra.mxu0 0.0
    %77 = vmatprep.subr.mxu0 0.0
    %78 = vmatpush1.msra.mxu0 0.0
    %79 = vmatprep.subr.mxu0 0.0
    %80 = vmatpush1.msra.mxu0 0.0
    %81 = vmatprep.subr.mxu0 0.0
    %82 = vmatpush1.msra.mxu0 0.0
    %83 = vmatprep.subr.mxu0 0.0
    %84 = vmatpush1.msra.mxu0 0.0
    %85 = vmatprep.subr.mxu0 0.0
    %86 = vmatpush1.msra.mxu0 0.0
    %87 = vmatprep.subr.mxu0 0.0
    %88 = vmatpush1.msra.mxu0 0.0
    %89 = vmatprep.subr.mxu0 0.0
    %90 = vmatpush1.msra.mxu0 0.0
    %91 = vmatprep.subr.mxu0 0.0
    %92 = vmatpush1.msra.mxu0 0.0
    %93 = vmatprep.subr.mxu0 0.0
    %94 = vmatpush1.msra.mxu0 0.0
    %95 = vmatprep.subr.mxu0 0.0
    %96 = vmatpush1.msra.mxu0 0.0
    %97 = vmatprep.subr.mxu0 0.0
    %98 = vmatpush1.msra.mxu0 0.0
    %99 = vmatprep.subr.mxu0 0.0
    %100 = vmatpush1.msra.mxu0 0.0
    %101 = vmatprep.subr.mxu0 0.0
    %102 = vmatpush1.msra.mxu0 %v29
    %103 = vmatprep.subr.mxu0 0.0
    %104 = vmatpush2.msra.mxu0 0.0
    %105 = vmatprep.subr.mxu0 0.0
    %106 = vmatpush2.msra.mxu0 0.0
    %107 = vmatprep.subr.mxu0 0.0
    %108 = vmatpush2.msra.mxu0 0.0
    %109 = vmatprep.subr.mxu0 0.0
    %110 = vmatpush2.msra.mxu0 0.0
    %111 = vmatprep.subr.mxu0 0.0
    %112 = vmatpush2.msra.mxu0 0.0
    %113 = vmatprep.subr.mxu0 0.0
    %114 = vmatpush2.msra.mxu0 0.0
    %115 = vmatprep.subr.mxu0 0.0
    %116 = vmatpush2.msra.mxu0 0.0
    %117 = vmatprep.subr.mxu0 0.0
    %118 = vmatpush2.msra.mxu0 0.0
    %119 = vmatprep.subr.mxu0 0.0
    %120 = vmatpush2.msra.mxu0 0.0
    %121 = vmatprep.subr.mxu0 0.0
    %122 = vmatpush2.msra.mxu0 0.0
    %123 = vmatprep.subr.mxu0 0.0
    %124 = vmatpush2.msra.mxu0 0.0
    %125 = vmatprep.subr.mxu0 0.0
    %126 = vmatpush2.msra.mxu0 0.0
    %127 = vmatprep.subr.mxu0 0.0
    %128 = vmatpush2.msra.mxu0 0.0
    %129 = vmatprep.subr.mxu0 0.0
    %130 = vmatpush2.msra.mxu0 0.0
    %131 = vmatprep.subr.mxu0 0.0
    %132 = vmatpush2.msra.mxu0 0.0
    %133 = vmatprep.subr.mxu0 0.0
    %134 = vmatpush2.msra.mxu0 0.0
    %135 = vmatprep.mubr.f32.mxu0 0.0
    %136 = vmatmul.mubr.f32.gmra.mxu0 %v60
    %v137 = vpop.f32.mrf.mxu0
    %v138 = vadd.f32 %v41, %v137
    %v139 = vpop.f32.mrf.mxu0
    %140 = vmatprep.mubr.f32.mxu0 0.0
    %141 = vmatmul.mubr.f32.gmra.mxu0 %v63
    %v142 = vpop.f32.mrf.mxu0
    %v143 = vadd.f32 %v46, %v142
    %v144 = vpop.f32.mrf.mxu0
    %145 = vmatprep.mubr.f32.mxu0 0.0
    %146 = vmatmul.mubr.f32.gmra.mxu0 %v66
    %v147 = vpop.f32.mrf.mxu0
    %v148 = vadd.f32 %v51, %v147
    %v149 = vpop.f32.mrf.mxu0
    %150 = vmatprep.mubr.f32.mxu0 0.0
    %151 = vmatmul.mubr.f32.gmra.mxu0 %v69
    %v152 = vpop.f32.mrf.mxu0
    %v153 = vadd.f32 %v56, %v152
    %v154 = vpop.f32.mrf.mxu0
    %155 = vdwg.mxu0
    %vm156 = vcmp.gt.f32.partialorder %v138, 0.0
    %vm157 = vcmp.gt.f32.partialorder %v143, 0.0
    %vm158 = vcmp.gt.f32.partialorder %v148, 0.0
    %vm159 = vcmp.gt.f32.partialorder %v153, 0.0
    %v160 = vmul.f32 %v138, 0.01
    %v161 = vmul.f32 %v143, 0.01
    %v162 = vmul.f32 %v148, 0.01
    %v163 = vmul.f32 %v153, 0.01
    %v164 = vsel %vm156, %v138, %v160
    %v165 = vsel %vm157, %v143, %v161
    %v166 = vsel %vm158, %v148, %v162
    %v167 = vsel %vm159, %v153, %v163
    %v168 = vld [vmem:[%s3] sm:$0xff]
    %v169 = vld [vmem:[%s3 + $0x8] sm:$0xff]
    %v170 = vld [vmem:[%s3 + $0x10] sm:$0xff]
    %v171 = vld [vmem:[%s3 + $0x18] sm:$0xff]
    %v172 = vld [vmem:[%s4] sm:$0xff]
    %v173 = vld [vmem:[%s4 + $0x8] sm:$0xff]
    %v174 = vld [vmem:[%s4 + $0x10] sm:$0xff]
    %v175 = vld [vmem:[%s4 + $0x18] sm:$0xff]
    %177 = vset.pattern.permute.xlu0 0
    %178 = vperm.xlu0 %177, %v172
    %v179 = vpop.permute.xlu0 %178
    %182 = vset.pattern.permute.xlu0 0
    %183 = vperm.xlu0 %182, %v173
    %v184 = vpop.permute.xlu0 %183
    %187 = vset.pattern.permute.xlu0 0
    %188 = vperm.xlu0 %187, %v174
    %v189 = vpop.permute.xlu0 %188
    %192 = vset.pattern.permute.xlu0 0
    %193 = vperm.xlu0 %192, %v175
    %v194 = vpop.permute.xlu0 %193
    %vm196 = vcmask 261120
    %v198 = vsel %vm196, %v168, 0
    %v201 = vsel %vm196, %v169, 0
    %v204 = vsel %vm196, %v170, 0
    %v207 = vsel %vm196, %v171, 0
    %209 = vmatprep.subr.mxu0 0.0
    %210 = vmatpush1.msra.mxu0 0.0
    %211 = vmatprep.subr.mxu0 0.0
    %212 = vmatpush1.msra.mxu0 0.0
    %213 = vmatprep.subr.mxu0 0.0
    %214 = vmatpush1.msra.mxu0 0.0
    %215 = vmatprep.subr.mxu0 0.0
    %216 = vmatpush1.msra.mxu0 0.0
    %217 = vmatprep.subr.mxu0 0.0
    %218 = vmatpush1.msra.mxu0 0.0
    %219 = vmatprep.subr.mxu0 0.0
    %220 = vmatpush1.msra.mxu0 0.0
    %221 = vmatprep.subr.mxu0 0.0
    %222 = vmatpush1.msra.mxu0 0.0
    %223 = vmatprep.subr.mxu0 0.0
    %224 = vmatpush1.msra.mxu0 0.0
    %225 = vmatprep.subr.mxu0 0.0
    %226 = vmatpush1.msra.mxu0 0.0
    %227 = vmatprep.subr.mxu0 0.0
    %228 = vmatpush1.msra.mxu0 0.0
    %229 = vmatprep.subr.mxu0 0.0
    %230 = vmatpush1.msra.mxu0 0.0
    %231 = vmatprep.subr.mxu0 0.0
    %232 = vmatpush1.msra.mxu0 0.0
    %233 = vmatprep.subr.mxu0 0.0
    %234 = vmatpush1.msra.mxu0 %v167
    %235 = vmatprep.subr.mxu0 0.0
    %236 = vmatpush1.msra.mxu0 %v166
    %237 = vmatprep.subr.mxu0 0.0
    %238 = vmatpush1.msra.mxu0 %v165
    %239 = vmatprep.subr.mxu0 0.0
    %240 = vmatpush1.msra.mxu0 %v164
    %241 = vmatprep.subr.mxu0 0.0
    %242 = vmatpush2.msra.mxu0 0.0
    %243 = vmatprep.subr.mxu0 0.0
    %244 = vmatpush2.msra.mxu0 0.0
    %245 = vmatprep.subr.mxu0 0.0
    %246 = vmatpush2.msra.mxu0 0.0
    %247 = vmatprep.subr.mxu0 0.0
    %248 = vmatpush2.msra.mxu0 0.0
    %249 = vmatprep.subr.mxu0 0.0
    %250 = vmatpush2.msra.mxu0 0.0
    %251 = vmatprep.subr.mxu0 0.0
    %252 = vmatpush2.msra.mxu0 0.0
    %253 = vmatprep.subr.mxu0 0.0
    %254 = vmatpush2.msra.mxu0 0.0
    %255 = vmatprep.subr.mxu0 0.0
    %256 = vmatpush2.msra.mxu0 0.0
    %257 = vmatprep.subr.mxu0 0.0
    %258 = vmatpush2.msra.mxu0 0.0
    %259 = vmatprep.subr.mxu0 0.0
    %260 = vmatpush2.msra.mxu0 0.0
    %261 = vmatprep.subr.mxu0 0.0
    %262 = vmatpush2.msra.mxu0 0.0
    %263 = vmatprep.subr.mxu0 0.0
    %264 = vmatpush2.msra.mxu0 0.0
    %265 = vmatprep.subr.mxu0 0.0
    %266 = vmatpush2.msra.mxu0 0.0
    %267 = vmatprep.subr.mxu0 0.0
    %268 = vmatpush2.msra.mxu0 0.0
    %269 = vmatprep.subr.mxu0 0.0
    %270 = vmatpush2.msra.mxu0 0.0
    %271 = vmatprep.subr.mxu0 0.0
    %272 = vmatpush2.msra.mxu0 0.0
    %273 = vmatprep.mubr.f32.mxu0 0.0
    %274 = vmatmul.mubr.f32.gmra.mxu0 %v198
    %v275 = vpop.f32.mrf.mxu0
    %v276 = vadd.f32 %v179, %v275
    %v277 = vpop.f32.mrf.mxu0
    %278 = vmatprep.mubr.f32.mxu0 0.0
    %279 = vmatmul.mubr.f32.gmra.mxu0 %v201
    %v280 = vpop.f32.mrf.mxu0
    %v281 = vadd.f32 %v184, %v280
    %v282 = vpop.f32.mrf.mxu0
    %283 = vmatprep.mubr.f32.mxu0 0.0
    %284 = vmatmul.mubr.f32.gmra.mxu0 %v204
    %v285 = vpop.f32.mrf.mxu0
    %v286 = vadd.f32 %v189, %v285
    %v287 = vpop.f32.mrf.mxu0
    %288 = vmatprep.mubr.f32.mxu0 0.0
    %289 = vmatmul.mubr.f32.gmra.mxu0 %v207
    %v290 = vpop.f32.mrf.mxu0
    %v291 = vadd.f32 %v194, %v290
    %v292 = vpop.f32.mrf.mxu0
    %293 = vdwg.mxu0
    %vm294 = vcmp.gt.f32.partialorder %v276, 0.0
    %vm295 = vcmp.gt.f32.partialorder %v281, 0.0
    %vm296 = vcmp.gt.f32.partialorder %v286, 0.0
    %vm297 = vcmp.gt.f32.partialorder %v291, 0.0
    %v298 = vmul.f32 %v276, 0.01
    %v299 = vmul.f32 %v281, 0.01
    %v300 = vmul.f32 %v286, 0.01
    %v301 = vmul.f32 %v291, 0.01
    %v302 = vsel %vm294, %v276, %v298
    %v303 = vsel %vm295, %v281, %v299
    %v304 = vsel %vm296, %v286, %v300
    %v305 = vsel %vm297, %v291, %v301
    %v306 = vld [vmem:[%s5] sm:$0x1]
    %v307 = vld [vmem:[#allocation2] sm:$0x1]
    %309 = vset.pattern.permute.xlu0 0
    %310 = vperm.xlu0 %309, %v307
    %v311 = vpop.permute.xlu0 %310
    %v313 = vlaneseq
    %v314 = vshrl.u32 %v313, 7
    %v315 = vsub.s32 0, %v314
    %v316 = vrot.slane %v311, %v315
    %v318 = vsel %vm196, %v306, 0
    %320 = vmatprep.subr.mxu0 0.0
    %321 = vmatpush1.msra.mxu0 0.0
    %322 = vmatprep.subr.mxu0 0.0
    %323 = vmatpush1.msra.mxu0 0.0
    %324 = vmatprep.subr.mxu0 0.0
    %325 = vmatpush1.msra.mxu0 0.0
    %326 = vmatprep.subr.mxu0 0.0
    %327 = vmatpush1.msra.mxu0 0.0
    %328 = vmatprep.subr.mxu0 0.0
    %329 = vmatpush1.msra.mxu0 0.0
    %330 = vmatprep.subr.mxu0 0.0
    %331 = vmatpush1.msra.mxu0 0.0
    %332 = vmatprep.subr.mxu0 0.0
    %333 = vmatpush1.msra.mxu0 0.0
    %334 = vmatprep.subr.mxu0 0.0
    %335 = vmatpush1.msra.mxu0 0.0
    %336 = vmatprep.subr.mxu0 0.0
    %337 = vmatpush1.msra.mxu0 0.0
    %338 = vmatprep.subr.mxu0 0.0
    %339 = vmatpush1.msra.mxu0 0.0
    %340 = vmatprep.subr.mxu0 0.0
    %341 = vmatpush1.msra.mxu0 0.0
    %342 = vmatprep.subr.mxu0 0.0
    %343 = vmatpush1.msra.mxu0 0.0
    %344 = vmatprep.subr.mxu0 0.0
    %345 = vmatpush1.msra.mxu0 %v305
    %346 = vmatprep.subr.mxu0 0.0
    %347 = vmatpush1.msra.mxu0 %v304
    %348 = vmatprep.subr.mxu0 0.0
    %349 = vmatpush1.msra.mxu0 %v303
    %350 = vmatprep.subr.mxu0 0.0
    %351 = vmatpush1.msra.mxu0 %v302
    %352 = vmatprep.subr.mxu0 0.0
    %353 = vmatpush2.msra.mxu0 0.0
    %354 = vmatprep.subr.mxu0 0.0
    %355 = vmatpush2.msra.mxu0 0.0
    %356 = vmatprep.subr.mxu0 0.0
    %357 = vmatpush2.msra.mxu0 0.0
    %358 = vmatprep.subr.mxu0 0.0
    %359 = vmatpush2.msra.mxu0 0.0
    %360 = vmatprep.subr.mxu0 0.0
    %361 = vmatpush2.msra.mxu0 0.0
    %362 = vmatprep.subr.mxu0 0.0
    %363 = vmatpush2.msra.mxu0 0.0
    %364 = vmatprep.subr.mxu0 0.0
    %365 = vmatpush2.msra.mxu0 0.0
    %366 = vmatprep.subr.mxu0 0.0
    %367 = vmatpush2.msra.mxu0 0.0
    %368 = vmatprep.subr.mxu0 0.0
    %369 = vmatpush2.msra.mxu0 0.0
    %370 = vmatprep.subr.mxu0 0.0
    %371 = vmatpush2.msra.mxu0 0.0
    %372 = vmatprep.subr.mxu0 0.0
    %373 = vmatpush2.msra.mxu0 0.0
    %374 = vmatprep.subr.mxu0 0.0
    %375 = vmatpush2.msra.mxu0 0.0
    %376 = vmatprep.subr.mxu0 0.0
    %377 = vmatpush2.msra.mxu0 0.0
    %378 = vmatprep.subr.mxu0 0.0
    %379 = vmatpush2.msra.mxu0 0.0
    %380 = vmatprep.subr.mxu0 0.0
    %381 = vmatpush2.msra.mxu0 0.0
    %382 = vmatprep.subr.mxu0 0.0
    %383 = vmatpush2.msra.mxu0 0.0
    %384 = vmatprep.mubr.f32.mxu0 0.0
    %385 = vmatmul.mubr.f32.gmra.mxu0 %v318
    %v386 = vpop.f32.mrf.mxu0
    %v387 = vadd.f32 %v316, %v386
    %v388 = vpop.f32.mrf.mxu0
    %389 = vdwg.mxu0
    %390 = vst [vmem:[#allocation3] sm:$0x1] %v387
    // Predicated region
    $region30: #{tpu_custom_call.1} parent=1 // pred_check
      _
    $region31: #{tpu_custom_call.1} parent=1 // pred_check_branch
      %392 = sbr.rel (0) target = $region33
    $region32: #{tpu_custom_call.1} parent=1 // pred_region
      %s394 = ssub.s32 16, 16
      %395 = vsyncadd [#allocation4], %s394
      %s397 = sshll.u32 [#allocation3], 4
      %s398 = int_to_ptr.vmem [resolvable:$true] %s397
      %400 = dma.vmem_to_hbm [thread:$0]  %s398, 16, %s7, [#allocation4]
    $region33: #{tpu_custom_call.1} parent=1 // pred_fallthru
      _
    // Predicated region
    $region34: #{tpu_custom_call.1} parent=1 // pred_check
      _
    $region35: #{tpu_custom_call.1} parent=1 // pred_check_branch
      %402 = sbr.rel (0) target = $region37
    $region36: #{tpu_custom_call.1} parent=1 // pred_region
      %403 = dma.done [#allocation4], 16
    $region37: #{tpu_custom_call.1} parent=1 // pred_fallthru
      _
    %404 = vsyncpa [#allocation4], 1

</llo_original>
